<compile_context>
chip_gen: v7x
topology: tpu7x:2x2x1
jax: 0.10.0
libtpu: 0.0.40
codegen_flags: <defaults>
</compile_context>

<pallas_src>
import math

import jax
import jax.numpy as jnp
from jax.experimental import pallas as pl
from jax.experimental.pallas import tpu as pltpu

IN_DIM = 300
HIDDEN = 128
OUT_DIM = 16


def _round_up(x, m):
    return ((x + m - 1) // m) * m


def mlp_softmax_kernel(x_ref, w1_ref, b1_ref, w2_ref, b2_ref, w3_ref, b3_ref,
                       o_ref):
    # (tile_b, 300) f32 -> bf16 for the MXU (f32 accumulation everywhere).
    x = x_ref[...].astype(jnp.bfloat16)

    # Linear(300->128) + ReLU
    h1 = jnp.dot(x, w1_ref[...], preferred_element_type=jnp.float32) + b1_ref[...]
    h1 = jnp.maximum(h1, 0.0).astype(jnp.bfloat16)                 # (tile_b, 128)

    # Linear(128->128) + ReLU
    h2 = jnp.dot(h1, w2_ref[...], preferred_element_type=jnp.float32) + b2_ref[...]
    h2 = jnp.maximum(h2, 0.0).astype(jnp.bfloat16)                 # (tile_b, 128)

    # Linear(128->16)
    logits = jnp.dot(h2, w3_ref[...], preferred_element_type=jnp.float32) + b3_ref[...]

    # Numerically stable softmax over dim=1 (exact normalization).
    m = jnp.max(logits, axis=1, keepdims=True)
    e = jnp.exp(logits - m)
    denom = jnp.sum(e, axis=1, keepdims=True)
    o_ref[...] = (e / denom).astype(o_ref.dtype)                   # (tile_b, 16)


def nn_forward(x, prepped, tile_b_cap=2048):
    """x: (B, IN_DIM) float32. prepped: output of prepare_params. Returns (B, OUT_DIM) f32."""
    w1, b1, w2, b2, w3, b3 = prepped
    B = x.shape[0]

    # Tile the batch: big enough to amortize per-step overhead, small enough that the
    # grid has >=2 steps for large B (so v7x can shard tiles across its 2 TCs), and
    # never larger than the (8-aligned) batch itself for tiny inputs.
    tile_b = max(8, min(tile_b_cap, _round_up(pl.cdiv(B, 2), 8)))
    tile_b = min(tile_b, _round_up(B, 8))
    grid = (pl.cdiv(B, tile_b),)

    out = pl.pallas_call(
        mlp_softmax_kernel,
        out_shape=jax.ShapeDtypeStruct((B, OUT_DIM), jnp.float32),
        grid=grid,
        in_specs=[
            pl.BlockSpec((tile_b, IN_DIM), lambda i: (i, 0)),     # x: batch-tiled, f32
            pl.BlockSpec((IN_DIM, HIDDEN), lambda i: (0, 0)),     # w1: resident bf16
            pl.BlockSpec((1, HIDDEN), lambda i: (0, 0)),          # b1: resident f32
            pl.BlockSpec((HIDDEN, HIDDEN), lambda i: (0, 0)),     # w2: resident bf16
            pl.BlockSpec((1, HIDDEN), lambda i: (0, 0)),          # b2: resident f32
            pl.BlockSpec((HIDDEN, OUT_DIM), lambda i: (0, 0)),    # w3: resident bf16
            pl.BlockSpec((1, OUT_DIM), lambda i: (0, 0)),         # b3: resident f32
        ],
        out_specs=pl.BlockSpec((tile_b, OUT_DIM), lambda i: (i, 0)),
        compiler_params=pltpu.CompilerParams(
            dimension_semantics=("parallel",),   # batch tiles are independent
        ),
    )(x, w1, b1, w2, b2, w3, b3)

    return out


def init_linear(key, fan_in, fan_out):
    """Deterministic init mimicking torch.nn.Linear defaults (kaiming_uniform a=sqrt(5))."""
    kw, kb = jax.random.split(key)
    bound_w = math.sqrt(6.0 / ((1.0 + 5.0) * fan_in))
    w = jax.random.uniform(kw, (fan_in, fan_out), jnp.float32, -bound_w, bound_w)
    bound_b = 1.0 / math.sqrt(fan_in)
    b = jax.random.uniform(kb, (1, fan_out), jnp.float32, -bound_b, bound_b)
    return w, b


def make_params(key):
    k1, k2, k3 = jax.random.split(key, 3)
    w1, b1 = init_linear(k1, IN_DIM, HIDDEN)
    w2, b2 = init_linear(k2, HIDDEN, HIDDEN)
    w3, b3 = init_linear(k3, HIDDEN, OUT_DIM)
    return {"w1": w1, "b1": b1, "w2": w2, "b2": b2, "w3": w3, "b3": b3}


def prepare_params(params):
    """One-time cast of weights to bf16 for the MXU (biases stay f32)."""
    w1 = params["w1"].astype(jnp.bfloat16)          # (300, 128)
    b1 = params["b1"].astype(jnp.float32)           # (1, 128)
    w2 = params["w2"].astype(jnp.bfloat16)          # (128, 128)
    b2 = params["b2"].astype(jnp.float32)           # (1, 128)
    w3 = params["w3"].astype(jnp.bfloat16)          # (128, 16)
    b3 = params["b3"].astype(jnp.float32)           # (1, 16)
    return (w1, b1, w2, b2, w3, b3)


def reference_forward(x, params):
    """Pure-JAX f32 reference of the PyTorch module's forward."""
    h1 = jnp.maximum(x @ params["w1"] + params["b1"], 0.0)
    h2 = jnp.maximum(h1 @ params["w2"] + params["b2"], 0.0)
    logits = h2 @ params["w3"] + params["b3"]
    return jax.nn.softmax(logits, axis=1)


if __name__ == "__main__":
    key = jax.random.PRNGKey(0)
    k_params, k_x = jax.random.split(key)

    params = make_params(k_params)
    prepped = prepare_params(params)

    batch = 8
    x = jax.random.normal(k_x, (batch, IN_DIM), jnp.float32)

    out = nn_forward(x, prepped)
    out = jax.block_until_ready(out)

    # sanity: shape, softmax rows sum to 1, close to f32 reference (bf16 matmuls).
    assert out.shape == (batch, OUT_DIM)
    row_sums = jnp.sum(out, axis=1)
    assert bool(jnp.all(jnp.abs(row_sums - 1.0) < 1e-4))
    ref = reference_forward(x, params)
    assert bool(jnp.all(jnp.abs(out - ref) < 5e-2))

    print("KERNEL_OK")
</pallas_src>

<mosaic_0001>
module attributes {stable_mosaic.version = 11 : i64} {
  func.func @mlp_softmax_kernel(%arg0: i32, %arg1: memref<8x300xf32, #tpu.memory_space<vmem>>, %arg2: memref<300x128xbf16, #tpu.memory_space<vmem>>, %arg3: memref<1x128xf32, #tpu.memory_space<vmem>>, %arg4: memref<128x128xbf16, #tpu.memory_space<vmem>>, %arg5: memref<1x128xf32, #tpu.memory_space<vmem>>, %arg6: memref<128x16xbf16, #tpu.memory_space<vmem>>, %arg7: memref<1x16xf32, #tpu.memory_space<vmem>>, %arg8: memref<8x16xf32, #tpu.memory_space<vmem>>) attributes {dimension_semantics = [#tpu.dimension_semantics<parallel>], iteration_bounds = array<i64: 1>, scalar_prefetch = 0 : i64, scratch_operands = 0 : i64, tpu.core_type = #tpu.core_type<tc>, window_params = [{transform_indices = @transform_0, window_bounds = array<i64: 8, 300>}, {pipeline_mode = #tpu.pipeline_mode<synchronous>, transform_indices = @transform_1, window_bounds = array<i64: 300, 128>}, {pipeline_mode = #tpu.pipeline_mode<synchronous>, transform_indices = @transform_2, window_bounds = array<i64: 1, 128>}, {pipeline_mode = #tpu.pipeline_mode<synchronous>, transform_indices = @transform_3, window_bounds = array<i64: 128, 128>}, {pipeline_mode = #tpu.pipeline_mode<synchronous>, transform_indices = @transform_4, window_bounds = array<i64: 1, 128>}, {pipeline_mode = #tpu.pipeline_mode<synchronous>, transform_indices = @transform_5, window_bounds = array<i64: 128, 16>}, {pipeline_mode = #tpu.pipeline_mode<synchronous>, transform_indices = @transform_6, window_bounds = array<i64: 1, 16>}, {transform_indices = @transform_7, window_bounds = array<i64: 8, 16>}]} {
    %c0 = arith.constant 0 : index
    %c0_0 = arith.constant 0 : index
    %0 = vector.load %arg1[%c0, %c0_0] : memref<8x300xf32, #tpu.memory_space<vmem>>, vector<8x300xf32>
    %1 = arith.truncf %0 : vector<8x300xf32> to vector<8x300xbf16>
    %c0_1 = arith.constant 0 : index
    %c0_2 = arith.constant 0 : index
    %2 = vector.load %arg2[%c0_1, %c0_2] : memref<300x128xbf16, #tpu.memory_space<vmem>>, vector<300x128xbf16>
    %cst = arith.constant dense<0.000000e+00> : vector<8x128xf32>
    %3 = tpu.matmul %1, %2, %cst {dimension_numbers = #tpu.dot_dimension_numbers<[1], [0], [0], [1], [0, 0, 1, 1], [], []>} : vector<8x300xbf16>, vector<300x128xbf16>, vector<8x128xf32> -> vector<8x128xf32>
    %c0_3 = arith.constant 0 : index
    %c0_4 = arith.constant 0 : index
    %4 = vector.load %arg3[%c0_3, %c0_4] : memref<1x128xf32, #tpu.memory_space<vmem>>, vector<1x128xf32>
    %5 = vector.broadcast %4 : vector<1x128xf32> to vector<8x128xf32>
    %6 = arith.addf %3, %5 : vector<8x128xf32>
    %cst_5 = arith.constant 0.000000e+00 : f32
    %7 = vector.broadcast %cst_5 : f32 to vector<8x128xf32>
    %8 = arith.maximumf %6, %7 : vector<8x128xf32>
    %9 = arith.truncf %8 : vector<8x128xf32> to vector<8x128xbf16>
    %c0_6 = arith.constant 0 : index
    %c0_7 = arith.constant 0 : index
    %10 = vector.load %arg4[%c0_6, %c0_7] : memref<128x128xbf16, #tpu.memory_space<vmem>>, vector<128x128xbf16>
    %cst_8 = arith.constant dense<0.000000e+00> : vector<8x128xf32>
    %11 = tpu.matmul %9, %10, %cst_8 {dimension_numbers = #tpu.dot_dimension_numbers<[1], [0], [0], [1], [0, 0, 1, 1], [], []>} : vector<8x128xbf16>, vector<128x128xbf16>, vector<8x128xf32> -> vector<8x128xf32>
    %c0_9 = arith.constant 0 : index
    %c0_10 = arith.constant 0 : index
    %12 = vector.load %arg5[%c0_9, %c0_10] : memref<1x128xf32, #tpu.memory_space<vmem>>, vector<1x128xf32>
    %13 = vector.broadcast %12 : vector<1x128xf32> to vector<8x128xf32>
    %14 = arith.addf %11, %13 : vector<8x128xf32>
    %cst_11 = arith.constant 0.000000e+00 : f32
    %15 = vector.broadcast %cst_11 : f32 to vector<8x128xf32>
    %16 = arith.maximumf %14, %15 : vector<8x128xf32>
    %17 = arith.truncf %16 : vector<8x128xf32> to vector<8x128xbf16>
    %c0_12 = arith.constant 0 : index
    %c0_13 = arith.constant 0 : index
    %18 = vector.load %arg6[%c0_12, %c0_13] : memref<128x16xbf16, #tpu.memory_space<vmem>>, vector<128x16xbf16>
    %cst_14 = arith.constant dense<0.000000e+00> : vector<8x16xf32>
    %19 = tpu.matmul %17, %18, %cst_14 {dimension_numbers = #tpu.dot_dimension_numbers<[1], [0], [0], [1], [0, 0, 1, 1], [], []>} : vector<8x128xbf16>, vector<128x16xbf16>, vector<8x16xf32> -> vector<8x16xf32>
    %c0_15 = arith.constant 0 : index
    %c0_16 = arith.constant 0 : index
    %20 = vector.load %arg7[%c0_15, %c0_16] : memref<1x16xf32, #tpu.memory_space<vmem>>, vector<1x16xf32>
    %21 = vector.broadcast %20 : vector<1x16xf32> to vector<8x16xf32>
    %22 = arith.addf %19, %21 : vector<8x16xf32>
    %cst_17 = arith.constant dense<0xFF800000> : vector<8xf32>
    %23 = vector.multi_reduction <maximumf>, %22, %cst_17 [1] : vector<8x16xf32> to vector<8xf32>
    %24 = vector.shape_cast %23 : vector<8xf32> to vector<8x1xf32>
    %25 = vector.broadcast %24 : vector<8x1xf32> to vector<8x16xf32>
    %26 = arith.subf %22, %25 : vector<8x16xf32>
    %27 = math.exp %26 : vector<8x16xf32>
    %cst_18 = arith.constant dense<0.000000e+00> : vector<8xf32>
    %28 = vector.multi_reduction <add>, %27, %cst_18 [1] : vector<8x16xf32> to vector<8xf32>
    %29 = vector.shape_cast %28 : vector<8xf32> to vector<8x1xf32>
    %30 = vector.broadcast %29 : vector<8x1xf32> to vector<8x16xf32>
    %31 = arith.divf %27, %30 : vector<8x16xf32>
    %c0_19 = arith.constant 0 : index
    %c0_20 = arith.constant 0 : index
    %32 = vector.load %arg8[%c0_19, %c0_20] : memref<8x16xf32, #tpu.memory_space<vmem>>, vector<8x16xf32>
    tpu.vector_store %arg8[%c0_19, %c0_20], %31 {strides = array<i32>} : memref<8x16xf32, #tpu.memory_space<vmem>>, vector<8x16xf32>,
    return
  }
  func.func @transform_0(%arg0: i32) -> (i32, i32) {
    %c0_i32 = arith.constant 0 : i32
    %c0_i32_0 = arith.constant 0 : i32
    return %arg0, %c0_i32 : i32, i32
  }
  func.func @transform_1(%arg0: i32) -> (i32, i32) {
    %c0_i32 = arith.constant 0 : i32
    %c0_i32_0 = arith.constant 0 : i32
    %c0_i32_1 = arith.constant 0 : i32
    return %c0_i32, %c0_i32_0 : i32, i32
  }
  func.func @transform_2(%arg0: i32) -> (i32, i32) {
    %c0_i32 = arith.constant 0 : i32
    %c0_i32_0 = arith.constant 0 : i32
    %c0_i32_1 = arith.constant 0 : i32
    return %c0_i32, %c0_i32_0 : i32, i32
  }
  func.func @transform_3(%arg0: i32) -> (i32, i32) {
    %c0_i32 = arith.constant 0 : i32
    %c0_i32_0 = arith.constant 0 : i32
    %c0_i32_1 = arith.constant 0 : i32
    return %c0_i32, %c0_i32_0 : i32, i32
  }
  func.func @transform_4(%arg0: i32) -> (i32, i32) {
    %c0_i32 = arith.constant 0 : i32
    %c0_i32_0 = arith.constant 0 : i32
    %c0_i32_1 = arith.constant 0 : i32
    return %c0_i32, %c0_i32_0 : i32, i32
  }
  func.func @transform_5(%arg0: i32) -> (i32, i32) {
    %c0_i32 = arith.constant 0 : i32
    %c0_i32_0 = arith.constant 0 : i32
    %c0_i32_1 = arith.constant 0 : i32
    return %c0_i32, %c0_i32_0 : i32, i32
  }
  func.func @transform_6(%arg0: i32) -> (i32, i32) {
    %c0_i32 = arith.constant 0 : i32
    %c0_i32_0 = arith.constant 0 : i32
    %c0_i32_1 = arith.constant 0 : i32
    return %c0_i32, %c0_i32_0 : i32, i32
  }
  func.func @transform_7(%arg0: i32) -> (i32, i32) {
    %c0_i32 = arith.constant 0 : i32
    %c0_i32_0 = arith.constant 0 : i32
    return %arg0, %c0_i32 : i32, i32
  }
}

</mosaic_0001>

<llo_original>
// kernel: tpu_custom_call.1
$region0: #{tpu_custom_call.1}
  #allocation0 [shape = 'u32[]', space=smem, size = 0x4, offset = 0x4, fixed_abs, tag = 'smem constant byte address 0x4 - core index']
  #allocation1 [shape = 'u32[144,128]{1,0:T(1,128)}', space=vmem, size = 0x12000, scoped, tag = 'internal scratch']
  %s0 = inlined_call_operand.hbm [shape: f32[8,300], index: 0, kind: input, shape index: {}]
  %s1 = inlined_call_operand.hbm [shape: bf16[300,128], index: 1, kind: input, shape index: {}]
  %s2 = inlined_call_operand.vmem [shape: f32[1,128], index: 2, kind: input, shape index: {}]
  %s3 = inlined_call_operand.vmem [shape: bf16[128,128], index: 3, kind: input, shape index: {}]
  %s4 = inlined_call_operand.vmem [shape: f32[1,128], index: 4, kind: input, shape index: {}]
  %s5 = inlined_call_operand.vmem [shape: bf16[128,16], index: 5, kind: input, shape index: {}]
  %s6 = inlined_call_operand.vmem [shape: f32[1,16], index: 6, kind: input, shape index: {}]
  %s7 = inlined_call_operand.hbm [shape: f32[8,16], index: 7, kind: output, shape index: {}]
  %s8 = sld [smem:[#allocation0]]
  $region46: #{tpu_custom_call.1} parent=0
    _
  %s10 = ssub.s32 1, %s8
  %s11 = scalar_select 0, %s10, %s8
  $region1: #{tpu_custom_call.1} parent=0
    #allocation2 [shape = 'u8[12288]{0}', space=vmem, size = 0x3000, scoped, tag = 'input window, operand 0, single buffered']
    #allocation3 [shape = 's32[1]{0}', space=sflag, size = 0x4, scoped, tag = 'scoped memory for tpu_custom_call.1']
    #allocation4 [shape = 's32[1]{0}', space=sflag, size = 0x4, scoped, tag = 'scoped memory for tpu_custom_call.1']
    #allocation5 [shape = 'u8[77824]{0}', space=vmem, size = 0x13000, scoped, tag = 'input window, operand 1, single buffered']
    #allocation6 [shape = 's32[1]{0}', space=sflag, size = 0x4, scoped, tag = 'scoped memory for tpu_custom_call.1']
    #allocation7 [shape = 'u8[4096]{0}', space=vmem, size = 0x1000, scoped, tag = 'output window, operand 0, single buffered']
    %12 = vsyncpa [#allocation3], 0
    %13 = vsyncpa [#allocation6], 0
    %14 = vsyncpa [#allocation4], 0
    // Predicated region
    $region2: #{tpu_custom_call.1} parent=1 // pred_check
      _
    $region3: #{tpu_custom_call.1} parent=1 // pred_check_branch
      %16 = sbr.rel (0) target = $region5
    $region4: #{tpu_custom_call.1} parent=1 // pred_region
      %s18 = ssub.s32 384, 384
      %19 = vsyncadd [#allocation3], %s18
      %s21 = sshll.u32 [#allocation2], 4
      %s22 = int_to_ptr.vmem [resolvable:$true] %s21
      %24 = dma.hbm_to_vmem [thread:$0]  %s0, 384, %s22, [#allocation3]
    $region5: #{tpu_custom_call.1} parent=1 // pred_fallthru
      _
    // Predicated region
    $region6: #{tpu_custom_call.1} parent=1 // pred_check
      _
    $region7: #{tpu_custom_call.1} parent=1 // pred_check_branch
      %26 = sbr.rel (0) target = $region9
    $region8: #{tpu_custom_call.1} parent=1 // pred_region
      %s28 = ssub.s32 2432, 2432
      %29 = vsyncadd [#allocation6], %s28
      %s30 = sshll.u32 [#allocation5], 4
      %s31 = int_to_ptr.vmem [resolvable:$true] %s30
      %36 = dma.hbm_to_vmem [thread:$0]  %s1, 2432, %s31, [#allocation6], 64, 64, 4
    $region9: #{tpu_custom_call.1} parent=1 // pred_fallthru
      _
    // Predicated region
    $region10: #{tpu_custom_call.1} parent=1 // pred_check
      _
    $region11: #{tpu_custom_call.1} parent=1 // pred_check_branch
      %38 = sbr.rel (0) target = $region13
    $region12: #{tpu_custom_call.1} parent=1 // pred_region
      _
    $region13: #{tpu_custom_call.1} parent=1 // pred_fallthru
      _
    // Predicated region
    $region14: #{tpu_custom_call.1} parent=1 // pred_check
      _
    $region15: #{tpu_custom_call.1} parent=1 // pred_check_branch
      %40 = sbr.rel (0) target = $region17
    $region16: #{tpu_custom_call.1} parent=1 // pred_region
      _
    $region17: #{tpu_custom_call.1} parent=1 // pred_fallthru
      _
    // Predicated region
    $region18: #{tpu_custom_call.1} parent=1 // pred_check
      _
    $region19: #{tpu_custom_call.1} parent=1 // pred_check_branch
      %42 = sbr.rel (0) target = $region21
    $region20: #{tpu_custom_call.1} parent=1 // pred_region
      _
    $region21: #{tpu_custom_call.1} parent=1 // pred_fallthru
      _
    // Predicated region
    $region22: #{tpu_custom_call.1} parent=1 // pred_check
      _
    $region23: #{tpu_custom_call.1} parent=1 // pred_check_branch
      %44 = sbr.rel (0) target = $region25
    $region24: #{tpu_custom_call.1} parent=1 // pred_region
      _
    $region25: #{tpu_custom_call.1} parent=1 // pred_fallthru
      _
    // Predicated region
    $region26: #{tpu_custom_call.1} parent=1 // pred_check
      _
    $region27: #{tpu_custom_call.1} parent=1 // pred_check_branch
      %46 = sbr.rel (0) target = $region29
    $region28: #{tpu_custom_call.1} parent=1 // pred_region
      _
    $region29: #{tpu_custom_call.1} parent=1 // pred_fallthru
      _
    // Predicated region
    $region30: #{tpu_custom_call.1} parent=1 // pred_check
      _
    $region31: #{tpu_custom_call.1} parent=1 // pred_check_branch
      %48 = sbr.rel (0) target = $region33
    $region32: #{tpu_custom_call.1} parent=1 // pred_region
      %49 = dma.done [#allocation3], 384
    $region33: #{tpu_custom_call.1} parent=1 // pred_fallthru
      _
    // Predicated region
    $region34: #{tpu_custom_call.1} parent=1 // pred_check
      _
    $region35: #{tpu_custom_call.1} parent=1 // pred_check_branch
      %51 = sbr.rel (0) target = $region37
    $region36: #{tpu_custom_call.1} parent=1 // pred_region
      %52 = dma.done [#allocation6], 2432
    $region37: #{tpu_custom_call.1} parent=1 // pred_fallthru
      _
    %v54 = vld [vmem:[#allocation2] sm:$0xff]
    %v55 = vld [vmem:[#allocation2 + $0x8] sm:$0xff]
    %v56 = vld [vmem:[#allocation2 + $0x10] sm:$0xff]
    %v57 = vpack.c.bf16 %v54, %v54
    %v58 = vpack.c.bf16 %v55, %v55
    %v59 = vpack.c.bf16 %v56, %v56
    %v60 = vld [vmem:[#allocation5] sm:$0xf]
    %v61 = vld [vmem:[#allocation5 + $0x4] sm:$0xf]
    %v62 = vld [vmem:[#allocation5 + $0x8] sm:$0xf]
    %v63 = vld [vmem:[#allocation5 + $0xc] sm:$0xf]
    %v64 = vld [vmem:[#allocation5 + $0x10] sm:$0xf]
    %v65 = vld [vmem:[#allocation5 + $0x14] sm:$0xf]
    %v66 = vld [vmem:[#allocation5 + $0x18] sm:$0xf]
    %v67 = vld [vmem:[#allocation5 + $0x1c] sm:$0xf]
    %v68 = vld [vmem:[#allocation5 + $0x20] sm:$0xf]
    %v69 = vld [vmem:[#allocation5 + $0x24] sm:$0xf]
    %v70 = vld [vmem:[#allocation5 + $0x28] sm:$0xf]
    %v71 = vld [vmem:[#allocation5 + $0x2c] sm:$0xf]
    %v72 = vld [vmem:[#allocation5 + $0x30] sm:$0xf]
    %v73 = vld [vmem:[#allocation5 + $0x34] sm:$0xf]
    %v74 = vld [vmem:[#allocation5 + $0x38] sm:$0xf]
    %v75 = vld [vmem:[#allocation5 + $0x3c] sm:$0xf]
    %v76 = vld [vmem:[#allocation5 + $0x40] sm:$0xf]
    %v77 = vld [vmem:[#allocation5 + $0x44] sm:$0xf]
    %v78 = vld [vmem:[#allocation5 + $0x48] sm:$0xf]
    %v79 = vld [vmem:[#allocation5 + $0x4c] sm:$0xf]
    %v80 = vld [vmem:[#allocation5 + $0x50] sm:$0xf]
    %v81 = vld [vmem:[#allocation5 + $0x54] sm:$0xf]
    %v82 = vld [vmem:[#allocation5 + $0x58] sm:$0xf]
    %v83 = vld [vmem:[#allocation5 + $0x5c] sm:$0xf]
    %v84 = vld [vmem:[#allocation5 + $0x60] sm:$0xf]
    %v85 = vld [vmem:[#allocation5 + $0x64] sm:$0xf]
    %v86 = vld [vmem:[#allocation5 + $0x68] sm:$0xf]
    %v87 = vld [vmem:[#allocation5 + $0x6c] sm:$0xf]
    %v88 = vld [vmem:[#allocation5 + $0x70] sm:$0xf]
    %v89 = vld [vmem:[#allocation5 + $0x74] sm:$0xf]
    %v90 = vld [vmem:[#allocation5 + $0x78] sm:$0xf]
    %v91 = vld [vmem:[#allocation5 + $0x7c] sm:$0xf]
    %v92 = vld [vmem:[#allocation5 + $0x80] sm:$0xf]
    %v93 = vld [vmem:[#allocation5 + $0x84] sm:$0xf]
    %v94 = vld [vmem:[#allocation5 + $0x88] sm:$0xf]
    %v95 = vld [vmem:[#allocation5 + $0x8c] sm:$0xf]
    %v96 = vld [vmem:[#allocation5 + $0x90] sm:$0xf]
    %v97 = vld [vmem:[#allocation5 + $0x94] sm:$0x3]
    %v98 = vld [vmem:[%s2] sm:$0x1]
    %v100 = vlaneseq
    %v101 = vshrl.u32 %v100, 7
    %v102 = vsub.s32 0, %v101
    %v103 = vrot.slane %v98, %v102
    %v143 = vunpack.c.l.b16 %v60
    %v144 = vunpack.c.l.b16 %v61
    %v145 = vunpack.c.l.b16 %v62
    %v146 = vunpack.c.l.b16 %v63
    %v147 = vunpack.c.l.b16 %v64
    %v148 = vunpack.c.l.b16 %v65
    %v149 = vunpack.c.l.b16 %v66
    %v150 = vunpack.c.l.b16 %v67
    %v151 = vunpack.c.l.b16 %v68
    %v152 = vunpack.c.l.b16 %v69
    %v153 = vunpack.c.l.b16 %v70
    %v154 = vunpack.c.l.b16 %v71
    %v155 = vunpack.c.l.b16 %v72
    %v156 = vunpack.c.l.b16 %v73
    %v157 = vunpack.c.l.b16 %v74
    %v158 = vunpack.c.l.b16 %v75
    %v159 = vunpack.c.l.b16 %v76
    %v160 = vunpack.c.l.b16 %v77
    %v161 = vunpack.c.l.b16 %v78
    %v162 = vunpack.c.l.b16 %v79
    %v163 = vunpack.c.l.b16 %v80
    %v164 = vunpack.c.l.b16 %v81
    %v165 = vunpack.c.l.b16 %v82
    %v166 = vunpack.c.l.b16 %v83
    %v167 = vunpack.c.l.b16 %v84
    %v168 = vunpack.c.l.b16 %v85
    %v169 = vunpack.c.l.b16 %v86
    %v170 = vunpack.c.l.b16 %v87
    %v171 = vunpack.c.l.b16 %v88
    %v172 = vunpack.c.l.b16 %v89
    %v173 = vunpack.c.l.b16 %v90
    %v174 = vunpack.c.l.b16 %v91
    %v175 = vunpack.c.l.b16 %v92
    %v176 = vunpack.c.l.b16 %v93
    %v177 = vunpack.c.l.b16 %v94
    %v178 = vunpack.c.l.b16 %v95
    %v179 = vunpack.c.l.b16 %v96
    %v180 = vunpack.c.l.b16 %v97
    %v181 = vpack.c.b16 %v144, %v143
    %v182 = vpack.c.b16 %v146, %v145
    %v183 = vpack.c.b16 %v148, %v147
    %v184 = vpack.c.b16 %v150, %v149
    %v185 = vpack.c.b16 %v152, %v151
    %v186 = vpack.c.b16 %v154, %v153
    %v187 = vpack.c.b16 %v156, %v155
    %v188 = vpack.c.b16 %v158, %v157
    %v189 = vpack.c.b16 %v160, %v159
    %v190 = vpack.c.b16 %v162, %v161
    %v191 = vpack.c.b16 %v164, %v163
    %v192 = vpack.c.b16 %v166, %v165
    %v193 = vpack.c.b16 %v168, %v167
    %v194 = vpack.c.b16 %v170, %v169
    %v195 = vpack.c.b16 %v172, %v171
    %v196 = vpack.c.b16 %v174, %v173
    %v197 = vpack.c.b16 %v176, %v175
    %v198 = vpack.c.b16 %v178, %v177
    %v199 = vpack.c.b16 %v180, %v179
    %vm218 = vcmask 359424
    %v220 = vsel %vm218, %v59, 0
    %vm222 = vcmask 1045504
    %v224 = vsel %vm222, %v199, 0
    %226 = vmatprep.subr.bf16.mxu0 0
    %227 = vmatpush1.bf16.msra.mxu0 %v181
    %228 = vmatprep.subr.bf16.mxu0 0
    %229 = vmatpush1.bf16.msra.mxu0 %v182
    %230 = vmatprep.subr.bf16.mxu0 0
    %231 = vmatpush1.bf16.msra.mxu0 %v183
    %232 = vmatprep.subr.bf16.mxu0 0
    %233 = vmatpush1.bf16.msra.mxu0 %v184
    %234 = vmatprep.subr.bf16.mxu0 0
    %235 = vmatpush1.bf16.msra.mxu0 %v185
    %236 = vmatprep.subr.bf16.mxu0 0
    %237 = vmatpush1.bf16.msra.mxu0 %v186
    %238 = vmatprep.subr.bf16.mxu0 0
    %239 = vmatpush1.bf16.msra.mxu0 %v187
    %240 = vmatprep.subr.bf16.mxu0 0
    %241 = vmatpush1.bf16.msra.mxu0 %v188
    %242 = vmatprep.subr.bf16.mxu0 0
    %243 = vmatpush1.bf16.msra.mxu0 %v189
    %244 = vmatprep.subr.bf16.mxu0 0
    %245 = vmatpush1.bf16.msra.mxu0 %v190
    %246 = vmatprep.subr.bf16.mxu0 0
    %247 = vmatpush1.bf16.msra.mxu0 %v191
    %248 = vmatprep.subr.bf16.mxu0 0
    %249 = vmatpush1.bf16.msra.mxu0 %v192
    %250 = vmatprep.subr.bf16.mxu0 0
    %251 = vmatpush1.bf16.msra.mxu0 %v193
    %252 = vmatprep.subr.bf16.mxu0 0
    %253 = vmatpush1.bf16.msra.mxu0 %v194
    %254 = vmatprep.subr.bf16.mxu0 0
    %255 = vmatpush1.bf16.msra.mxu0 %v195
    %256 = vmatprep.subr.bf16.mxu0 0
    %257 = vmatpush1.bf16.msra.mxu0 %v196
    %258 = vmatprep.mubr.bf16.mxu0 %v58
    %259 = vmatmul.mubr.bf16.gmra.mrb[0].mxu0 %v57
    %v260 = vpop.f32.mrb[0].mxu0
    %v261 = vadd.f32 %v103, %v260
    %v262 = vpop.f32.mrb[0].mxu0
    %v263 = vpop.f32.mrb[0].mxu0
    %v264 = vpop.f32.mrb[0].mxu0
    %265 = vdwg.mxu0
    %266 = vmatprep.subr.bf16.mxu0 0
    %267 = vmatpush1.bf16.msra.mxu0 %v197
    %268 = vmatprep.subr.bf16.mxu0 0
    %269 = vmatpush1.bf16.msra.mxu0 %v198
    %270 = vmatprep.subr.bf16.mxu0 0
    %271 = vmatpush1.bf16.msra.mxu0 %v224
    %272 = vmatprep.subr.bf16.mxu0 0
    %273 = vmatpush1.bf16.msra.mxu0 0
    %274 = vmatprep.subr.bf16.mxu0 0
    %275 = vmatpush1.bf16.msra.mxu0 0
    %276 = vmatprep.subr.bf16.mxu0 0
    %277 = vmatpush1.bf16.msra.mxu0 0
    %278 = vmatprep.subr.bf16.mxu0 0
    %279 = vmatpush1.bf16.msra.mxu0 0
    %280 = vmatprep.subr.bf16.mxu0 0
    %281 = vmatpush1.bf16.msra.mxu0 0
    %282 = vmatprep.subr.bf16.mxu0 0
    %283 = vmatpush1.bf16.msra.mxu0 0
    %284 = vmatprep.subr.bf16.mxu0 0
    %285 = vmatpush1.bf16.msra.mxu0 0
    %286 = vmatprep.subr.bf16.mxu0 0
    %287 = vmatpush1.bf16.msra.mxu0 0
    %288 = vmatprep.subr.bf16.mxu0 0
    %289 = vmatpush1.bf16.msra.mxu0 0
    %290 = vmatprep.subr.bf16.mxu0 0
    %291 = vmatpush1.bf16.msra.mxu0 0
    %292 = vmatprep.subr.bf16.mxu0 0
    %293 = vmatpush1.bf16.msra.mxu0 0
    %294 = vmatprep.subr.bf16.mxu0 0
    %295 = vmatpush1.bf16.msra.mxu0 0
    %296 = vmatprep.subr.bf16.mxu0 0
    %297 = vmatpush1.bf16.msra.mxu0 0
    %298 = vmatprep.mubr.bf16.mxu0 0
    %299 = vmatmul.mubr.bf16.gmra.mrb[0].mxu0 %v220
    %v300 = vpop.f32.mrb[0].mxu0
    %v301 = vadd.f32 %v261, %v300
    %v302 = vpop.f32.mrb[0].mxu0
    %v303 = vpop.f32.mrb[0].mxu0
    %v304 = vpop.f32.mrb[0].mxu0
    %305 = vdwg.mxu0
    %v306 = vmax.f32 %v301, 0.0
    %v307 = vpack.c.bf16 %v306, %v306
    %v308 = vld [vmem:[%s3] sm:$0xf]
    %v309 = vld [vmem:[%s3 + $0x4] sm:$0xf]
    %v310 = vld [vmem:[%s3 + $0x8] sm:$0xf]
    %v311 = vld [vmem:[%s3 + $0xc] sm:$0xf]
    %v312 = vld [vmem:[%s3 + $0x10] sm:$0xf]
    %v313 = vld [vmem:[%s3 + $0x14] sm:$0xf]
    %v314 = vld [vmem:[%s3 + $0x18] sm:$0xf]
    %v315 = vld [vmem:[%s3 + $0x1c] sm:$0xf]
    %v316 = vld [vmem:[%s3 + $0x20] sm:$0xf]
    %v317 = vld [vmem:[%s3 + $0x24] sm:$0xf]
    %v318 = vld [vmem:[%s3 + $0x28] sm:$0xf]
    %v319 = vld [vmem:[%s3 + $0x2c] sm:$0xf]
    %v320 = vld [vmem:[%s3 + $0x30] sm:$0xf]
    %v321 = vld [vmem:[%s3 + $0x34] sm:$0xf]
    %v322 = vld [vmem:[%s3 + $0x38] sm:$0xf]
    %v323 = vld [vmem:[%s3 + $0x3c] sm:$0xf]
    %v324 = vld [vmem:[%s4] sm:$0x1]
    %v326 = vlaneseq
    %v327 = vshrl.u32 %v326, 7
    %v328 = vsub.s32 0, %v327
    %v329 = vrot.slane %v324, %v328
    %v347 = vunpack.c.l.b16 %v308
    %v348 = vunpack.c.l.b16 %v309
    %v349 = vunpack.c.l.b16 %v310
    %v350 = vunpack.c.l.b16 %v311
    %v351 = vunpack.c.l.b16 %v312
    %v352 = vunpack.c.l.b16 %v313
    %v353 = vunpack.c.l.b16 %v314
    %v354 = vunpack.c.l.b16 %v315
    %v355 = vunpack.c.l.b16 %v316
    %v356 = vunpack.c.l.b16 %v317
    %v357 = vunpack.c.l.b16 %v318
    %v358 = vunpack.c.l.b16 %v319
    %v359 = vunpack.c.l.b16 %v320
    %v360 = vunpack.c.l.b16 %v321
    %v361 = vunpack.c.l.b16 %v322
    %v362 = vunpack.c.l.b16 %v323
    %v363 = vpack.c.b16 %v348, %v347
    %v364 = vpack.c.b16 %v350, %v349
    %v365 = vpack.c.b16 %v352, %v351
    %v366 = vpack.c.b16 %v354, %v353
    %v367 = vpack.c.b16 %v356, %v355
    %v368 = vpack.c.b16 %v358, %v357
    %v369 = vpack.c.b16 %v360, %v359
    %v370 = vpack.c.b16 %v362, %v361
    %379 = vmatprep.subr.bf16.mxu0 0
    %380 = vmatpush1.bf16.msra.mxu0 %v363
    %381 = vmatprep.subr.bf16.mxu0 0
    %382 = vmatpush1.bf16.msra.mxu0 %v364
    %383 = vmatprep.subr.bf16.mxu0 0
    %384 = vmatpush1.bf16.msra.mxu0 %v365
    %385 = vmatprep.subr.bf16.mxu0 0
    %386 = vmatpush1.bf16.msra.mxu0 %v366
    %387 = vmatprep.subr.bf16.mxu0 0
    %388 = vmatpush1.bf16.msra.mxu0 %v367
    %389 = vmatprep.subr.bf16.mxu0 0
    %390 = vmatpush1.bf16.msra.mxu0 %v368
    %391 = vmatprep.subr.bf16.mxu0 0
    %392 = vmatpush1.bf16.msra.mxu0 %v369
    %393 = vmatprep.subr.bf16.mxu0 0
    %394 = vmatpush1.bf16.msra.mxu0 %v370
    %395 = vmatprep.subr.bf16.mxu0 0
    %396 = vmatpush1.bf16.msra.mxu0 0
    %397 = vmatprep.subr.bf16.mxu0 0
    %398 = vmatpush1.bf16.msra.mxu0 0
    %399 = vmatprep.subr.bf16.mxu0 0
    %400 = vmatpush1.bf16.msra.mxu0 0
    %401 = vmatprep.subr.bf16.mxu0 0
    %402 = vmatpush1.bf16.msra.mxu0 0
    %403 = vmatprep.subr.bf16.mxu0 0
    %404 = vmatpush1.bf16.msra.mxu0 0
    %405 = vmatprep.subr.bf16.mxu0 0
    %406 = vmatpush1.bf16.msra.mxu0 0
    %407 = vmatprep.subr.bf16.mxu0 0
    %408 = vmatpush1.bf16.msra.mxu0 0
    %409 = vmatprep.subr.bf16.mxu0 0
    %410 = vmatpush1.bf16.msra.mxu0 0
    %411 = vmatprep.mubr.bf16.mxu0 0
    %412 = vmatmul.mubr.bf16.gmra.mrb[0].mxu0 %v307
    %v413 = vpop.f32.mrb[0].mxu0
    %v414 = vadd.f32 %v329, %v413
    %v415 = vpop.f32.mrb[0].mxu0
    %v416 = vpop.f32.mrb[0].mxu0
    %v417 = vpop.f32.mrb[0].mxu0
    %418 = vdwg.mxu0
    %v419 = vmax.f32 %v414, 0.0
    %v420 = vpack.c.bf16 %v419, %v419
    %v421 = vld [vmem:[%s5] sm:$0xf]
    %v422 = vld [vmem:[%s5 + $0x4] sm:$0xf]
    %v423 = vld [vmem:[%s5 + $0x8] sm:$0xf]
    %v424 = vld [vmem:[%s5 + $0xc] sm:$0xf]
    %v425 = vld [vmem:[%s5 + $0x10] sm:$0xf]
    %v426 = vld [vmem:[%s5 + $0x14] sm:$0xf]
    %v427 = vld [vmem:[%s5 + $0x18] sm:$0xf]
    %v428 = vld [vmem:[%s5 + $0x1c] sm:$0xf]
    %v429 = vld [vmem:[%s5 + $0x20] sm:$0xf]
    %v430 = vld [vmem:[%s5 + $0x24] sm:$0xf]
    %v431 = vld [vmem:[%s5 + $0x28] sm:$0xf]
    %v432 = vld [vmem:[%s5 + $0x2c] sm:$0xf]
    %v433 = vld [vmem:[%s5 + $0x30] sm:$0xf]
    %v434 = vld [vmem:[%s5 + $0x34] sm:$0xf]
    %v435 = vld [vmem:[%s5 + $0x38] sm:$0xf]
    %v436 = vld [vmem:[%s5 + $0x3c] sm:$0xf]
    %v437 = vld [vmem:[%s6] sm:$0x1]
    %v439 = vlaneseq
    %v440 = vshrl.u32 %v439, 7
    %v441 = vsub.s32 0, %v440
    %v442 = vrot.slane %v437, %v441
    %v460 = vunpack.c.l.b16 %v421
    %v461 = vunpack.c.l.b16 %v422
    %v462 = vunpack.c.l.b16 %v423
    %v463 = vunpack.c.l.b16 %v424
    %v464 = vunpack.c.l.b16 %v425
    %v465 = vunpack.c.l.b16 %v426
    %v466 = vunpack.c.l.b16 %v427
    %v467 = vunpack.c.l.b16 %v428
    %v468 = vunpack.c.l.b16 %v429
    %v469 = vunpack.c.l.b16 %v430
    %v470 = vunpack.c.l.b16 %v431
    %v471 = vunpack.c.l.b16 %v432
    %v472 = vunpack.c.l.b16 %v433
    %v473 = vunpack.c.l.b16 %v434
    %v474 = vunpack.c.l.b16 %v435
    %v475 = vunpack.c.l.b16 %v436
    %v476 = vpack.c.b16 %v461, %v460
    %v477 = vpack.c.b16 %v463, %v462
    %v478 = vpack.c.b16 %v465, %v464
    %v479 = vpack.c.b16 %v467, %v466
    %v480 = vpack.c.b16 %v469, %v468
    %v481 = vpack.c.b16 %v471, %v470
    %v482 = vpack.c.b16 %v473, %v472
    %v483 = vpack.c.b16 %v475, %v474
    %492 = vmatprep.subr.bf16.mxu0 0
    %493 = vmatpush1.bf16.msra.mxu0 %v476
    %494 = vmatprep.subr.bf16.mxu0 0
    %495 = vmatpush1.bf16.msra.mxu0 %v477
    %496 = vmatprep.subr.bf16.mxu0 0
    %497 = vmatpush1.bf16.msra.mxu0 %v478
    %498 = vmatprep.subr.bf16.mxu0 0
    %499 = vmatpush1.bf16.msra.mxu0 %v479
    %500 = vmatprep.subr.bf16.mxu0 0
    %501 = vmatpush1.bf16.msra.mxu0 %v480
    %502 = vmatprep.subr.bf16.mxu0 0
    %503 = vmatpush1.bf16.msra.mxu0 %v481
    %504 = vmatprep.subr.bf16.mxu0 0
    %505 = vmatpush1.bf16.msra.mxu0 %v482
    %506 = vmatprep.subr.bf16.mxu0 0
    %507 = vmatpush1.bf16.msra.mxu0 %v483
    %508 = vmatprep.subr.bf16.mxu0 0
    %509 = vmatpush1.bf16.msra.mxu0 0
    %510 = vmatprep.subr.bf16.mxu0 0
    %511 = vmatpush1.bf16.msra.mxu0 0
    %512 = vmatprep.subr.bf16.mxu0 0
    %513 = vmatpush1.bf16.msra.mxu0 0
    %514 = vmatprep.subr.bf16.mxu0 0
    %515 = vmatpush1.bf16.msra.mxu0 0
    %516 = vmatprep.subr.bf16.mxu0 0
    %517 = vmatpush1.bf16.msra.mxu0 0
    %518 = vmatprep.subr.bf16.mxu0 0
    %519 = vmatpush1.bf16.msra.mxu0 0
    %520 = vmatprep.subr.bf16.mxu0 0
    %521 = vmatpush1.bf16.msra.mxu0 0
    %522 = vmatprep.subr.bf16.mxu0 0
    %523 = vmatpush1.bf16.msra.mxu0 0
    %524 = vmatprep.mubr.bf16.mxu0 0
    %525 = vmatmul.mubr.bf16.gmra.mrb[0].mxu0 %v420
    %v526 = vpop.f32.mrb[0].mxu0
    %v527 = vadd.f32 %v442, %v526
    %v528 = vpop.f32.mrb[0].mxu0
    %v529 = vpop.f32.mrb[0].mxu0
    %v530 = vpop.f32.mrb[0].mxu0
    %531 = vdwg.mxu0
    %vm532 = vcmask 130048
    %v533 = vsel %vm532, %v527, -inf
    %534 = vmax.xlane.f32.xlu0 %v533
    %v535 = vpop.xlane.xlu0 %534
    %v536 = vsub.f32 %v527, %v535
    %v537 = vmul.f32 %v536, 1.442695
    %v538 = vpow.pop %v537
    %v539 = vsel %vm532, %v538, 0.0
    %540 = vadd.xlane.f32.xlu0 %v539
    %v541 = vpop.xlane.xlu0 %540
    %v542 = vrcp.pop %v541
    %v543 = vmul.f32 %v538, %v542
    %544 = vst.msk [vmem:[#allocation7] sm:$0xff] %vm532, %v543
    // Predicated region
    $region38: #{tpu_custom_call.1} parent=1 // pred_check
      _
    $region39: #{tpu_custom_call.1} parent=1 // pred_check_branch
      %546 = sbr.rel (0) target = $region41
    $region40: #{tpu_custom_call.1} parent=1 // pred_region
      %s548 = ssub.s32 128, 128
      %549 = vsyncadd [#allocation4], %s548
      %s551 = sshll.u32 [#allocation7], 4
      %s552 = int_to_ptr.vmem [resolvable:$true] %s551
      %554 = dma.vmem_to_hbm [thread:$0]  %s552, 128, %s7, [#allocation4]
    $region41: #{tpu_custom_call.1} parent=1 // pred_fallthru
      _
    // Predicated region
    $region42: #{tpu_custom_call.1} parent=1 // pred_check
      _
    $region43: #{tpu_custom_call.1} parent=1 // pred_check_branch
      %556 = sbr.rel (0) target = $region45
    $region44: #{tpu_custom_call.1} parent=1 // pred_region
      %557 = dma.done [#allocation4], 128
    $region45: #{tpu_custom_call.1} parent=1 // pred_fallthru
      _
    %558 = vsyncpa [#allocation3], 1
    %559 = vsyncpa [#allocation6], 1
    %560 = vsyncpa [#allocation4], 1

</llo_original>
